<compile_context>
chip_gen: v7x
topology: tpu7x:2x2x1
jax: 0.10.0
libtpu: 0.0.40
codegen_flags: <defaults>
</compile_context>

<pallas_src>
import functools
import math

import jax
import jax.numpy as jnp
from jax import lax
from jax.experimental import pallas as pl
from jax.experimental.pallas import tpu as pltpu

_EPS = 1e-5


def _round_up(n, m):
    return ((n + m - 1) // m) * m


# --------------------------------------------------------------------------
# Batch norm ('batch'): stats pass + apply pass over the flattened (N, D) view
# --------------------------------------------------------------------------
def _bn_stats_kernel(x_ref, sum_ref, sq_ref):
    @pl.when(pl.program_id(0) == 0)
    def _():
        sum_ref[...] = jnp.zeros_like(sum_ref)
        sq_ref[...] = jnp.zeros_like(sq_ref)

    x = x_ref[...].astype(jnp.float32)                      # (row_tile, D)
    sum_ref[...] += jnp.sum(x, axis=0, keepdims=True)       # (1, D)
    sq_ref[...] += jnp.sum(x * x, axis=0, keepdims=True)    # (1, D)


def _bn_apply_kernel(x_ref, sum_ref, sq_ref, gamma_ref, beta_ref, o_ref, *,
                     count, eps):
    x = x_ref[...].astype(jnp.float32)                      # (row_tile, D)
    inv_n = 1.0 / count
    mean = sum_ref[...] * inv_n                             # (1, D)
    var = sq_ref[...] * inv_n - mean * mean                 # biased variance
    inv_std = lax.rsqrt(var + eps)
    scale = gamma_ref[...] * inv_std                        # (1, D)
    shift = beta_ref[...] - mean * scale                    # (1, D)
    o_ref[...] = (x * scale + shift).astype(o_ref.dtype)    # one FMA / element


def batch_norm_pallas(x, gamma, beta, eps=_EPS, row_tile=None):
    B, S, D = x.shape
    N = B * S
    x2 = x.reshape(N, D)

    if row_tile is None:
        row_tile = 256 if N >= 256 else _round_up(N, 8)
    n_pad = _round_up(N, row_tile)
    if n_pad != N:
        # Zero rows contribute nothing to sum / sumsq; count uses the true N.
        x2 = jnp.pad(x2, ((0, n_pad - N), (0, 0)))
    grid = (n_pad // row_tile,)

    sums, sqs = pl.pallas_call(
        _bn_stats_kernel,
        out_shape=(jax.ShapeDtypeStruct((1, D), jnp.float32),
                   jax.ShapeDtypeStruct((1, D), jnp.float32)),
        grid_spec=pl.GridSpec(
            grid=grid,
            in_specs=[pl.BlockSpec((row_tile, D), lambda i: (i, 0))],
            out_specs=(pl.BlockSpec((1, D), lambda i: (0, 0)),
                       pl.BlockSpec((1, D), lambda i: (0, 0))),
        ),
        compiler_params=pltpu.CompilerParams(
            dimension_semantics=("arbitrary",)),
    )(x2)

    apply_kernel = functools.partial(_bn_apply_kernel, count=float(N), eps=eps)
    y = pl.pallas_call(
        apply_kernel,
        out_shape=jax.ShapeDtypeStruct((n_pad, D), x.dtype),
        grid_spec=pl.GridSpec(
            grid=grid,
            in_specs=[
                pl.BlockSpec((row_tile, D), lambda i: (i, 0)),
                pl.BlockSpec((1, D), lambda i: (0, 0)),   # sums   (resident)
                pl.BlockSpec((1, D), lambda i: (0, 0)),   # sumsq  (resident)
                pl.BlockSpec((1, D), lambda i: (0, 0)),   # gamma  (resident)
                pl.BlockSpec((1, D), lambda i: (0, 0)),   # beta   (resident)
            ],
            out_specs=pl.BlockSpec((row_tile, D), lambda i: (i, 0)),
        ),
        compiler_params=pltpu.CompilerParams(
            dimension_semantics=("parallel",)),
    )(x2, sums, sqs, gamma.reshape(1, D), beta.reshape(1, D))

    return y[:N].reshape(B, S, D)


# --------------------------------------------------------------------------
# Instance norm ('instance'): per-(batch, channel) stats over the seq axis
# --------------------------------------------------------------------------
def _instance_norm_kernel(x_ref, gamma_ref, beta_ref, o_ref, *, eps):
    x = x_ref[...].astype(jnp.float32)                      # (bt, S, D)
    mean = jnp.mean(x, axis=1, keepdims=True)               # (bt, 1, D)
    diff = x - mean
    var = jnp.mean(diff * diff, axis=1, keepdims=True)      # biased
    inv_std = lax.rsqrt(var + eps)
    y = diff * (inv_std * gamma_ref[...]) + beta_ref[...]
    o_ref[...] = y.astype(o_ref.dtype)


def instance_norm_pallas(x, gamma, beta, eps=_EPS, batch_tile=1):
    B, S, D = x.shape
    assert B % batch_tile == 0
    kernel = functools.partial(_instance_norm_kernel, eps=eps)
    return pl.pallas_call(
        kernel,
        out_shape=jax.ShapeDtypeStruct((B, S, D), x.dtype),
        grid_spec=pl.GridSpec(
            grid=(B // batch_tile,),
            in_specs=[
                pl.BlockSpec((batch_tile, S, D), lambda i: (i, 0, 0)),
                pl.BlockSpec((1, 1, D), lambda i: (0, 0, 0)),
                pl.BlockSpec((1, 1, D), lambda i: (0, 0, 0)),
            ],
            out_specs=pl.BlockSpec((batch_tile, S, D), lambda i: (i, 0, 0)),
        ),
        compiler_params=pltpu.CompilerParams(
            dimension_semantics=("parallel",)),
    )(x, gamma.reshape(1, 1, D), beta.reshape(1, 1, D))


# --------------------------------------------------------------------------
# Layer-ish norm ('layer'): per-batch stats over (seq, embed), UNBIASED var
# --------------------------------------------------------------------------
def _layer_norm_kernel(x_ref, o_ref, *, eps, n_elem):
    x = x_ref[...].astype(jnp.float32)                      # (bt, S, D)
    mean = jnp.mean(x, axis=(1, 2), keepdims=True)          # (bt, 1, 1)
    diff = x - mean
    var = jnp.sum(diff * diff, axis=(1, 2), keepdims=True) / (n_elem - 1.0)
    o_ref[...] = (diff * lax.rsqrt(var + eps)).astype(o_ref.dtype)


def layer_norm_pallas(x, eps=_EPS, batch_tile=1):
    B, S, D = x.shape
    assert B % batch_tile == 0
    kernel = functools.partial(_layer_norm_kernel, eps=eps, n_elem=float(S * D))
    return pl.pallas_call(
        kernel,
        out_shape=jax.ShapeDtypeStruct((B, S, D), x.dtype),
        grid_spec=pl.GridSpec(
            grid=(B // batch_tile,),
            in_specs=[pl.BlockSpec((batch_tile, S, D), lambda i: (i, 0, 0))],
            out_specs=pl.BlockSpec((batch_tile, S, D), lambda i: (i, 0, 0)),
        ),
        compiler_params=pltpu.CompilerParams(
            dimension_semantics=("parallel",)),
    )(x)


# --------------------------------------------------------------------------
# Module-equivalent wrapper
# --------------------------------------------------------------------------
def normalization_forward(x, normalization='batch', gamma=None, beta=None,
                          eps=_EPS, **kwargs):
    """Forward pass of the PyTorch Normalization module (training mode)."""
    if normalization == 'layer':
        return layer_norm_pallas(x, eps=eps, **kwargs)
    if normalization == 'batch':
        return batch_norm_pallas(x, gamma, beta, eps=eps, **kwargs)
    if normalization == 'instance':
        return instance_norm_pallas(x, gamma, beta, eps=eps, **kwargs)
    # Unknown normalizer type -> identity (matches the module's else branch).
    return x
    # TODO(synk): BatchNorm1d running_mean/running_var tracking (momentum /
    # eval-mode path) is stateful and is not replicated here; this implements
    # the training-mode (batch-statistics) forward only.


# --------------------------------------------------------------------------
# Self test
# --------------------------------------------------------------------------
if __name__ == "__main__":
    B, S, D = 2, 8, 128          # batch, graph_size, embed_dim (lane-dense)
    key = jax.random.PRNGKey(0)
    kx, kg, kb = jax.random.split(key, 3)

    x = jax.random.normal(kx, (B, S, D), dtype=jnp.float32)

    # init_parameters(): uniform(-stdv, stdv), stdv = 1/sqrt(param.size(-1))
    stdv = 1.0 / math.sqrt(D)
    gamma = jax.random.uniform(kg, (D,), minval=-stdv, maxval=stdv,
                               dtype=jnp.float32)
    beta = jax.random.uniform(kb, (D,), minval=-stdv, maxval=stdv,
                              dtype=jnp.float32)

    out_batch = normalization_forward(x, 'batch', gamma, beta, row_tile=8)
    out_inst = normalization_forward(x, 'instance', gamma, beta)
    out_layer = normalization_forward(x, 'layer')
    jax.block_until_ready((out_batch, out_inst, out_layer))

    # ---- pure-JAX references -------------------------------------------
    x2 = x.reshape(-1, D)
    mean_b = x2.mean(axis=0)
    var_b = x2.var(axis=0)                                   # biased
    ref_batch = (((x2 - mean_b) / jnp.sqrt(var_b + _EPS)) * gamma
                 + beta).reshape(B, S, D)

    mean_i = x.mean(axis=1, keepdims=True)
    var_i = x.var(axis=1, keepdims=True)                     # biased
    ref_inst = (x - mean_i) / jnp.sqrt(var_i + _EPS) * gamma + beta

    mean_l = x.mean(axis=(1, 2), keepdims=True)
    var_l = x.var(axis=(1, 2), ddof=1, keepdims=True)        # unbiased
    ref_layer = (x - mean_l) / jnp.sqrt(var_l + _EPS)

    assert out_batch.shape == (B, S, D)
    assert jnp.allclose(out_batch, ref_batch, atol=1e-4, rtol=1e-4), \
        "batch norm mismatch"
    assert jnp.allclose(out_inst, ref_inst, atol=1e-4, rtol=1e-4), \
        "instance norm mismatch"
    assert jnp.allclose(out_layer, ref_layer, atol=1e-4, rtol=1e-4), \
        "layer norm mismatch"

    print("KERNEL_OK")
</pallas_src>

<mosaic_0001>
module attributes {stable_mosaic.version = 11 : i64} {
  func.func @_bn_stats_kernel(%arg0: i32, %arg1: memref<8x128xf32, #tpu.memory_space<vmem>>, %arg2: memref<1x128xf32, #tpu.memory_space<vmem>>, %arg3: memref<1x128xf32, #tpu.memory_space<vmem>>) attributes {dimension_semantics = [#tpu.dimension_semantics<arbitrary>], iteration_bounds = array<i64: 2>, scalar_prefetch = 0 : i64, scratch_operands = 0 : i64, tpu.core_type = #tpu.core_type<tc>, window_params = [{transform_indices = @transform_0, window_bounds = array<i64: 8, 128>}, {pipeline_mode = #tpu.pipeline_mode<synchronous>, transform_indices = @transform_1, window_bounds = array<i64: 1, 128>}, {pipeline_mode = #tpu.pipeline_mode<synchronous>, transform_indices = @transform_2, window_bounds = array<i64: 1, 128>}]} {
    %c0_i32 = arith.constant 0 : i32
    %0 = arith.cmpi eq, %arg0, %c0_i32 : i32
    %1 = arith.extui %0 : i1 to i32
    %c0_i32_0 = arith.constant 0 : i32
    %2 = arith.cmpi ne, %1, %c0_i32_0 : i32
    scf.if %2 {
      %cst_11 = arith.constant 0.000000e+00 : f32
      %15 = vector.broadcast %cst_11 : f32 to vector<1x128xf32>
      %c0_12 = arith.constant 0 : index
      %c0_13 = arith.constant 0 : index
      %16 = vector.load %arg2[%c0_12, %c0_13] : memref<1x128xf32, #tpu.memory_space<vmem>>, vector<1x128xf32>
      tpu.vector_store %arg2[%c0_12, %c0_13], %15 {strides = array<i32>} : memref<1x128xf32, #tpu.memory_space<vmem>>, vector<1x128xf32>,
      %cst_14 = arith.constant 0.000000e+00 : f32
      %17 = vector.broadcast %cst_14 : f32 to vector<1x128xf32>
      %c0_15 = arith.constant 0 : index
      %c0_16 = arith.constant 0 : index
      %18 = vector.load %arg3[%c0_15, %c0_16] : memref<1x128xf32, #tpu.memory_space<vmem>>, vector<1x128xf32>
      tpu.vector_store %arg3[%c0_15, %c0_16], %17 {strides = array<i32>} : memref<1x128xf32, #tpu.memory_space<vmem>>, vector<1x128xf32>,
    } else {
    }
    %c0 = arith.constant 0 : index
    %c0_1 = arith.constant 0 : index
    %3 = vector.load %arg1[%c0, %c0_1] : memref<8x128xf32, #tpu.memory_space<vmem>>, vector<8x128xf32>
    %c0_2 = arith.constant 0 : index
    %c0_3 = arith.constant 0 : index
    %4 = vector.load %arg2[%c0_2, %c0_3] : memref<1x128xf32, #tpu.memory_space<vmem>>, vector<1x128xf32>
    %cst = arith.constant dense<0.000000e+00> : vector<128xf32>
    %5 = vector.multi_reduction <add>, %3, %cst [0] : vector<8x128xf32> to vector<128xf32>
    %6 = vector.shape_cast %5 : vector<128xf32> to vector<1x128xf32>
    %7 = arith.addf %4, %6 : vector<1x128xf32>
    %c0_4 = arith.constant 0 : index
    %c0_5 = arith.constant 0 : index
    %8 = vector.load %arg2[%c0_4, %c0_5] : memref<1x128xf32, #tpu.memory_space<vmem>>, vector<1x128xf32>
    tpu.vector_store %arg2[%c0_4, %c0_5], %7 {strides = array<i32>} : memref<1x128xf32, #tpu.memory_space<vmem>>, vector<1x128xf32>,
    %c0_6 = arith.constant 0 : index
    %c0_7 = arith.constant 0 : index
    %9 = vector.load %arg3[%c0_6, %c0_7] : memref<1x128xf32, #tpu.memory_space<vmem>>, vector<1x128xf32>
    %10 = arith.mulf %3, %3 : vector<8x128xf32>
    %cst_8 = arith.constant dense<0.000000e+00> : vector<128xf32>
    %11 = vector.multi_reduction <add>, %10, %cst_8 [0] : vector<8x128xf32> to vector<128xf32>
    %12 = vector.shape_cast %11 : vector<128xf32> to vector<1x128xf32>
    %13 = arith.addf %9, %12 : vector<1x128xf32>
    %c0_9 = arith.constant 0 : index
    %c0_10 = arith.constant 0 : index
    %14 = vector.load %arg3[%c0_9, %c0_10] : memref<1x128xf32, #tpu.memory_space<vmem>>, vector<1x128xf32>
    tpu.vector_store %arg3[%c0_9, %c0_10], %13 {strides = array<i32>} : memref<1x128xf32, #tpu.memory_space<vmem>>, vector<1x128xf32>,
    return
  }
  func.func @transform_0(%arg0: i32) -> (i32, i32) {
    %c0_i32 = arith.constant 0 : i32
    %c0_i32_0 = arith.constant 0 : i32
    return %arg0, %c0_i32 : i32, i32
  }
  func.func @transform_1(%arg0: i32) -> (i32, i32) {
    %c0_i32 = arith.constant 0 : i32
    %c0_i32_0 = arith.constant 0 : i32
    %c0_i32_1 = arith.constant 0 : i32
    return %c0_i32, %c0_i32_0 : i32, i32
  }
  func.func @transform_2(%arg0: i32) -> (i32, i32) {
    %c0_i32 = arith.constant 0 : i32
    %c0_i32_0 = arith.constant 0 : i32
    %c0_i32_1 = arith.constant 0 : i32
    return %c0_i32, %c0_i32_0 : i32, i32
  }
}

</mosaic_0001>

<llo_original>
// kernel: tpu_custom_call.1
$region0: #{tpu_custom_call.1}
  #allocation0 [shape = 'u32[]', space=smem, size = 0x4, offset = 0x4, fixed_abs, tag = 'smem constant byte address 0x4 - core index']
  #allocation1 [shape = 'u32[144,128]{1,0:T(1,128)}', space=vmem, size = 0x12000, scoped, tag = 'internal scratch']
  %s0 = inlined_call_operand.hbm [shape: f32[16,128], index: 0, kind: input, shape index: {}]
  %s1 = inlined_call_operand.hbm [shape: f32[1,128], index: 1, kind: output, shape index: {0}]
  %s2 = inlined_call_operand.hbm [shape: f32[1,128], index: 2, kind: output, shape index: {1}]
  %3 = xla_tuple %s1, %s2
  %s4 = sld [smem:[#allocation0]]
  $region53: #{tpu_custom_call.1} parent=0
    _
  %s6 = ssub.s32 1, %s4
  %s7 = scalar_select 0, %s6, %s4
  $region1: #{tpu_custom_call.1} parent=0
    #allocation2 [shape = 'u8[8192]{0}', space=vmem, size = 0x2000, scoped, tag = 'input window, operand 0']
    #allocation3 [shape = 's32[2]{0}', space=sflag, size = 0x8, scoped, tag = 'scoped memory for tpu_custom_call.1']
    #allocation4 [shape = 's32[2]{0}', space=sflag, size = 0x8, scoped, tag = 'scoped memory for tpu_custom_call.1']
    #allocation5 [shape = 'u8[512]{0}', space=vmem, size = 0x400, scoped, tag = 'output window, operand 0, single buffered']
    #allocation6 [shape = 'u8[512]{0}', space=vmem, size = 0x400, scoped, tag = 'output window, operand 1, single buffered']
    #allocation7 [shape = 's32[1]{0}', space=sflag, size = 0x4, scoped, tag = 'scoped memory for tpu_custom_call.1']
    %8 = vsyncpa [#allocation3], 0
    %s9 = scalar_lea.sflag [#allocation3], 1
    %10 = vsyncpa %s9, 0
    %11 = vsyncpa [#allocation4], 0
    %12 = vsyncpa [#allocation7], 0
    loop: start=0, step=1, limit=4
    $region2: #{tpu_custom_call.1} parent=1 // loop_pre_header
      _
    $region3: #{tpu_custom_call.1} parent=1 // loop_header
      %s14 = sphi 0, %s18
      %p15 = scmp.ge.s32.totalorder %s14, 4
      %s24 = sphi 0, %s26
      %s27 = sphi 0, %s24
      %s28 = sphi 0, %s27
      %s44 = sphi 0, %s28
      %s48 = sphi 0, %s48
      %s50 = sphi 0, %s48
      %s51 = sphi 0, %s50
      %s65 = sphi 0, %s51
      %s69 = sphi 0, %s69
      %s71 = sphi 0, %s69
      %s72 = sphi 0, %s71
      %s86 = sphi 0, %s72
    $region4: #{tpu_custom_call.1} parent=1 // loop_header_branch
      %17 = sbr.rel (%p15) target = $region8
    $region5: #{tpu_custom_call.1} parent=1 // loop_body
      %s19 = ssub.s32 %s14, 1
      %s20 = ssub.s32 %s14, 2
      %s21 = sadd.s32 %s14, 1
      %s22 = ssub.s32 %s14, %s21
      %p23 = scmp.eq.s32.totalorder %s22, 0
      %s25 = sadd.s32 %s24, 1
      %s26 = scalar_select %p23, %s24, %s25
      %p29 = pneg %p23
      %p30 = scmp.eq.s32.totalorder %s14, 1
      %p31 = por %p29, %p30
      %p32 = scmp.ne.s32.totalorder %s24, %s27
      %p33 = scmp.eq.s32.totalorder %s14, 0
      %p34 = por %p32, %p33
      %p35 = scmp.ne.s32.totalorder %s24, %s27
      %p36 = scmp.eq.s32.totalorder %s19, 1
      %p37 = por %p35, %p36
      %p38 = scmp.ne.s32.totalorder %s27, %s28
      %p39 = scmp.eq.s32.totalorder %s19, 0
      %p40 = por %p38, %p39
      %p41 = scmp.ne.s32.totalorder %s27, %s28
      %p42 = scmp.eq.s32.totalorder %s20, 1
      %p43 = por %p41, %p42
      %p45 = scmp.ne.s32.totalorder %s28, %s44
      %p46 = scmp.eq.s32.totalorder %s20, 0
      %p47 = por %p45, %p46
      %s49 = sadd.s32 %s48, 1
      %p52 = scmp.eq.s32.totalorder %s14, 1
      %p53 = scmp.ne.s32.totalorder %s48, %s50
      %p54 = scmp.eq.s32.totalorder %s14, 0
      %p55 = por %p53, %p54
      %p56 = scmp.ne.s32.totalorder %s48, %s50
      %p57 = scmp.eq.s32.totalorder %s19, 1
      %p58 = por %p56, %p57
      %p59 = scmp.ne.s32.totalorder %s50, %s51
      %p60 = scmp.eq.s32.totalorder %s19, 0
      %p61 = por %p59, %p60
      %p62 = scmp.ne.s32.totalorder %s50, %s51
      %p63 = scmp.eq.s32.totalorder %s20, 1
      %p64 = por %p62, %p63
      %p66 = scmp.ne.s32.totalorder %s51, %s65
      %p67 = scmp.eq.s32.totalorder %s20, 0
      %p68 = por %p66, %p67
      %s70 = sadd.s32 %s69, 1
      %p73 = scmp.eq.s32.totalorder %s14, 1
      %p74 = scmp.ne.s32.totalorder %s69, %s71
      %p75 = scmp.eq.s32.totalorder %s14, 0
      %p76 = por %p74, %p75
      %p77 = scmp.ne.s32.totalorder %s69, %s71
      %p78 = scmp.eq.s32.totalorder %s19, 1
      %p79 = por %p77, %p78
      %p80 = scmp.ne.s32.totalorder %s71, %s72
      %p81 = scmp.eq.s32.totalorder %s19, 0
      %p82 = por %p80, %p81
      %p83 = scmp.ne.s32.totalorder %s71, %s72
      %p84 = scmp.eq.s32.totalorder %s20, 1
      %p85 = por %p83, %p84
      %p87 = scmp.ne.s32.totalorder %s72, %s86
      %p88 = scmp.eq.s32.totalorder %s20, 0
      %p89 = por %p87, %p88
      %p90 = scmp.le.s32.totalorder 1, %s14
      %p91 = scmp.lt.s32.totalorder %s14, 3
      %p92 = pnand %p90, %p91
      %p93 = pneg %p92
      // Predicated region
      $region9: #{tpu_custom_call.1} parent=5 // pred_check
        _
      $region10: #{tpu_custom_call.1} parent=5 // pred_check_branch
        %95 = sbr.rel (%p92) target = $region12
      $region11: #{tpu_custom_call.1} parent=5 // pred_region
        %s96 = ssub.s32 %s14, 1
      $region12: #{tpu_custom_call.1} parent=5 // pred_fallthru
        _
      %p97 = scmp.lt.s32.totalorder %s14, 2
      // Predicated region
      $region13: #{tpu_custom_call.1} parent=5 // pred_check
        %p98 = pneg %p97
      $region14: #{tpu_custom_call.1} parent=5 // pred_check_branch
        %100 = sbr.rel (%p98) target = $region16
      $region15: #{tpu_custom_call.1} parent=5 // pred_region
        // Predicated region
        $region17: #{tpu_custom_call.1} parent=15 // pred_check
          %p101 = pneg %p34
        $region18: #{tpu_custom_call.1} parent=15 // pred_check_branch
          %103 = sbr.rel (%p101) target = $region20
        $region19: #{tpu_custom_call.1} parent=15 // pred_region
          %s104 = sand.u32 %s24, 1
          %s105 = scalar_lea.sflag [#allocation3], %s104
          %s106 = sand.u32 %s24, 1
          %s107 = smul.addr %s106, 8
          %s108 = scalar_lea.vmem [#allocation2], %s107
          %s110 = ssub.s32 128, 128
          %111 = vsyncadd %s105, %s110
          %s112 = smul.addr %s14, 128
          %s113 = scalar_lea.hbm %s0, %s112
          %s115 = sshll.u32 %s108, 4
          %s116 = int_to_ptr.vmem [resolvable:$true] %s115
          %118 = dma.hbm_to_vmem [thread:$0]  %s113, 128, %s116, %s105
        $region20: #{tpu_custom_call.1} parent=15 // pred_fallthru
          _
      $region16: #{tpu_custom_call.1} parent=5 // pred_fallthru
        _
      %p119 = scmp.le.s32.totalorder 1, %s14
      %p120 = scmp.lt.s32.totalorder %s14, 3
      %p121 = pnand %p119, %p120
      %p122 = pneg %p121
      // Predicated region
      $region21: #{tpu_custom_call.1} parent=5 // pred_check
        _
      $region22: #{tpu_custom_call.1} parent=5 // pred_check_branch
        %124 = sbr.rel (%p121) target = $region24
      $region23: #{tpu_custom_call.1} parent=5 // pred_region
        %s125 = ssub.s32 %s14, 1
        %s126 = sand.u32 %s27, 1
        %s127 = scalar_lea.sflag [#allocation3], %s126
        %s128 = sand.u32 %s27, 1
        %s129 = smul.addr %s128, 8
        %s130 = scalar_lea.vmem [#allocation2], %s129
        // Predicated region
        $region25: #{tpu_custom_call.1} parent=23 // pred_check
          %p131 = pneg %p40
        $region26: #{tpu_custom_call.1} parent=23 // pred_check_branch
          %133 = sbr.rel (%p131) target = $region28
        $region27: #{tpu_custom_call.1} parent=23 // pred_region
          %134 = dma.done %s127, 128
        $region28: #{tpu_custom_call.1} parent=23 // pred_fallthru
          _
        %s135 = sand.u32 %s27, 1
        %s136 = scalar_lea.sflag [#allocation3], %s135
        %s137 = sand.u32 %s27, 1
        %s138 = smul.addr %s137, 8
        %s139 = scalar_lea.vmem [#allocation2], %s138
        %p140 = pneg %p40
        %p141 = pneg %p37
        %p142 = pneg %p61
        %p143 = pneg %p58
        %p144 = pneg %p82
        %p145 = pneg %p79
        %p146 = scmp.eq.s32.totalorder %s19, 0
        // Predicated region
        $region29: #{tpu_custom_call.1} parent=23 // pred_check
          %p147 = pneg %p146
        $region30: #{tpu_custom_call.1} parent=23 // pred_check_branch
          %149 = sbr.rel (%p147) target = $region32
        $region31: #{tpu_custom_call.1} parent=23 // pred_region
          %150 = vst [vmem:[#allocation5] sm:$0x1] 0.0
          %151 = vst [vmem:[#allocation6] sm:$0x1] 0.0
        $region32: #{tpu_custom_call.1} parent=23 // pred_fallthru
          _
        %v152 = vld [vmem:[%s130] sm:$0xff]
        %v153 = vld [vmem:[#allocation5] sm:$0x1]
        %v154 = vrot.slane %v152, 4
        %v155 = vadd.f32 %v152, %v154
        %v156 = vrot.slane %v155, 2
        %v157 = vadd.f32 %v155, %v156
        %v158 = vrot.slane %v157, 1
        %v159 = vadd.f32 %v157, %v158
        %v160 = vadd.f32 %v153, %v159
        %161 = vst [vmem:[#allocation5] sm:$0x1] %v160
        %v162 = vld [vmem:[#allocation6] sm:$0x1]
        %v163 = vmul.f32 %v152, %v152
        %v164 = vrot.slane %v163, 4
        %v165 = vadd.f32 %v163, %v164
        %v166 = vrot.slane %v165, 2
        %v167 = vadd.f32 %v165, %v166
        %v168 = vrot.slane %v167, 1
        %v169 = vadd.f32 %v167, %v168
        %v170 = vadd.f32 %v162, %v169
        %171 = vst [vmem:[#allocation6] sm:$0x1] %v170
        // Predicated region
        $region33: #{tpu_custom_call.1} parent=23 // pred_check
          %p172 = pneg %p58
        $region34: #{tpu_custom_call.1} parent=23 // pred_check_branch
          %174 = sbr.rel (%p172) target = $region36
        $region35: #{tpu_custom_call.1} parent=23 // pred_region
          %s176 = ssub.s32 16, 16
          %177 = vsyncadd [#allocation4], %s176
          %s179 = sshll.u32 [#allocation5], 4
          %s180 = int_to_ptr.vmem [resolvable:$true] %s179
          %182 = dma.vmem_to_hbm [thread:$0]  %s180, 16, %s1, [#allocation4]
        $region36: #{tpu_custom_call.1} parent=23 // pred_fallthru
          _
        // Predicated region
        $region37: #{tpu_custom_call.1} parent=23 // pred_check
          %p183 = pneg %p79
        $region38: #{tpu_custom_call.1} parent=23 // pred_check_branch
          %185 = sbr.rel (%p183) target = $region40
        $region39: #{tpu_custom_call.1} parent=23 // pred_region
          %s187 = ssub.s32 16, 16
          %188 = vsyncadd [#allocation7], %s187
          %s190 = sshll.u32 [#allocation6], 4
          %s191 = int_to_ptr.vmem [resolvable:$true] %s190
          %193 = dma.vmem_to_hbm [thread:$0]  %s191, 16, %s2, [#allocation7]
        $region40: #{tpu_custom_call.1} parent=23 // pred_fallthru
          _
        // Predicated region
        $region41: #{tpu_custom_call.1} parent=23 // pred_check
          %p194 = pneg %p58
        $region42: #{tpu_custom_call.1} parent=23 // pred_check_branch
          %196 = sbr.rel (%p194) target = $region44
        $region43: #{tpu_custom_call.1} parent=23 // pred_region
          %197 = dma.done [#allocation4], 16
        $region44: #{tpu_custom_call.1} parent=23 // pred_fallthru
          _
        // Predicated region
        $region45: #{tpu_custom_call.1} parent=23 // pred_check
          %p198 = pneg %p79
        $region46: #{tpu_custom_call.1} parent=23 // pred_check_branch
          %200 = sbr.rel (%p198) target = $region48
        $region47: #{tpu_custom_call.1} parent=23 // pred_region
          %201 = dma.done [#allocation7], 16
        $region48: #{tpu_custom_call.1} parent=23 // pred_fallthru
          _
      $region24: #{tpu_custom_call.1} parent=5 // pred_fallthru
        _
      %p202 = scmp.le.s32.totalorder 2, %s14
      // Predicated region
      $region49: #{tpu_custom_call.1} parent=5 // pred_check
        %p203 = pneg %p202
      $region50: #{tpu_custom_call.1} parent=5 // pred_check_branch
        %205 = sbr.rel (%p203) target = $region52
      $region51: #{tpu_custom_call.1} parent=5 // pred_region
        %s206 = ssub.s32 %s14, 2
      $region52: #{tpu_custom_call.1} parent=5 // pred_fallthru
        _
    $region6: #{tpu_custom_call.1} parent=1 // loop_footer
      %s18 = sadd.s32 1, %s14
    $region7: #{tpu_custom_call.1} parent=1 // loop_footer_branch
      %13 = sbr.rel target = $region3
    $region8: #{tpu_custom_call.1} parent=1 // loop_exit
      _
    %207 = vsyncpa [#allocation3], 1
    %s208 = scalar_lea.sflag [#allocation3], 1
    %209 = vsyncpa %s208, 1
    %210 = vsyncpa [#allocation4], 1
    %s211 = scalar_lea.sflag [#allocation4], 1
    %212 = vsyncpa %s211, 1
    %213 = vsyncpa [#allocation7], 1

</llo_original>
